<compile_context>
chip_gen: v5e
topology: v5e:2x2
jax: 0.10.0
libtpu: 0.0.40
codegen_flags: <defaults>
</compile_context>

<pallas_src>
import functools

import jax
import jax.numpy as jnp
from jax import lax
from jax.experimental import pallas as pl
from jax.experimental.pallas import tpu as pltpu


def _dh_slabs(a, H, N):
    """a: (N*H, W*C) stack of lane-dense images (row r = image r//H, row r%H).
    Returns (N*H, 3*W*C) whose dh block (columns [dh*W*C:(dh+1)*W*C]) holds row
    h+dh-1 of the *same* image at row h, and zeros where h+dh-1 falls outside
    [0, H) — i.e. the three vertical taps of a 3x3 conv with padding=1, with
    the shift never leaking across an image boundary."""
    NH, WC = a.shape
    z = jnp.zeros((1, WC), a.dtype)
    up = jnp.concatenate([z, a[:-1, :]], axis=0)   # row r -> a[r-1]
    dn = jnp.concatenate([a[1:, :], z], axis=0)    # row r -> a[r+1]
    if N > 1:
        # Re-zero rows that leaked across an image boundary.
        row = lax.broadcasted_iota(jnp.int32, (NH, WC), 0)
        top = row == H          # first row of images 1..N-1
        bot = row == H - 1      # last row of images 0..N-2
        for n in range(2, N):
            top = top | (row == n * H)
            bot = bot | (row == n * H - 1)
        up = jnp.where(top, jnp.zeros_like(a), up)
        dn = jnp.where(bot, jnp.zeros_like(a), dn)
    return jnp.concatenate([up, a, dn], axis=1)


def basic_block_kernel(H, N, x_ref, w1_ref, w2_ref, b_ref, o_ref):
    # x_ref : (N*H, W*Cin)       f32, lane-dense (lane = w*Cin + cin)
    # w1_ref: (3*W*Cin, W*Cmid)  bf16 banded conv1 matrix, BN1 scale folded in
    # w2_ref: (3*W*Cmid, W*Cmid) bf16 banded conv2 matrix, BN2 scale folded in
    # b_ref : (2, W*Cmid)        f32 fused BN biases (row 0 = bn1, row 1 = bn2)
    # o_ref : (N*H, W*Cmid)      f32
    x = x_ref[...]                                           # (NH, WC) f32

    # ---- conv1 (+ folded bn1 scale): one MXU matmul over the whole batch ----
    lhs1 = _dh_slabs(x, H, N).astype(jnp.bfloat16)           # (NH, 3*WC) bf16
    y = jnp.dot(lhs1, w1_ref[...], preferred_element_type=jnp.float32)
    y = jnp.maximum(y + b_ref[0:1, :], 0.0)                  # bn1 bias + relu (f32)

    # ---- conv2 (+ folded bn2 scale) ----
    lhs2 = _dh_slabs(y, H, N).astype(jnp.bfloat16)
    y2 = jnp.dot(lhs2, w2_ref[...], preferred_element_type=jnp.float32)

    # ---- bn2 bias + identity residual (exact f32 x) + relu; full slab store ----
    o_ref[...] = jnp.maximum(y2 + b_ref[1:2, :] + x, 0.0)


def _conv3x3_to_banded(w_oihw, W, scale, dtype=jnp.bfloat16):
    """(Cout, Cin, 3, 3) OIHW conv weight -> (3*W*Cin, W*Cout) banded matrix B so
    that conv3x3(x, pad=1, stride=1) == _dh_slabs(x_lane) @ B in the lane-dense
    (H, W*C) layout.  The per-output-channel BN scale is folded into the
    columns; the spatial W-padding is folded in as structurally-zero rows."""
    Cout, Cin, kh, kw = w_oihw.shape
    w = jnp.transpose(w_oihw, (2, 3, 1, 0)).astype(jnp.float32)   # (kh, kw, Cin, Cout)
    w = w * scale                                                 # fold BN scale (per Cout)
    wi = jnp.arange(W)
    wo = jnp.arange(W)
    dw = jnp.arange(kw)
    band = (wi[None, :, None] == wo[None, None, :] + dw[:, None, None] - 1)
    band = band.astype(jnp.float32)                               # (kw, W, W)
    B = jnp.einsum('hkio,kvw->hviwo', w, band)                    # (kh, W, Cin, W, Cout)
    return B.reshape(kh * W * Cin, W * Cout).astype(dtype)


def prepare_basic_block_params(w1_oihw, bn1, w2_oihw, bn2, W, eps=1e-5):
    """One-time (weight-load time) prep: banded conv matrices with the BN scale
    folded in, plus the two fused BN bias rows packed into a single operand."""
    def fuse(params):
        gamma, beta, mean, var = params
        scale = gamma / jnp.sqrt(var + eps)
        return scale, beta - mean * scale

    s1, b1 = fuse(bn1)
    s2, b2 = fuse(bn2)
    w1m = _conv3x3_to_banded(w1_oihw, W, s1)                      # (3*W*Cin, W*Cmid)
    w2m = _conv3x3_to_banded(w2_oihw, W, s2)                      # (3*W*Cmid, W*Cmid)
    # Tile biases over W so lane (w*Cmid + c) picks up channel c's bias.
    b = jnp.stack([jnp.tile(b1, W), jnp.tile(b2, W)]).astype(jnp.float32)
    return w1m, w2m, b


def basic_block_lane(x_lane, params, H, N):
    """Lane-dense forward: (N*H, W*C) f32 -> (N*H, W*C) f32.  Chain several
    blocks in this layout; only convert to/from NCHW at the model boundary."""
    w1m, w2m, b = params
    NH, WCi = x_lane.shape
    WCm = w1m.shape[1]
    return pl.pallas_call(
        functools.partial(basic_block_kernel, H, N),
        out_shape=jax.ShapeDtypeStruct((NH, WCm), jnp.float32),
        grid=(1,),
        in_specs=[
            pl.BlockSpec((NH, WCi), lambda i: (0, 0)),
            pl.BlockSpec((3 * WCi, WCm), lambda i: (0, 0)),
            pl.BlockSpec((3 * WCm, WCm), lambda i: (0, 0)),
            pl.BlockSpec((2, WCm), lambda i: (0, 0)),
        ],
        out_specs=pl.BlockSpec((NH, WCm), lambda i: (0, 0)),
        compiler_params=pltpu.CompilerParams(
            dimension_semantics=("arbitrary",)),
    )(x_lane, w1m, w2m, b)


def basic_block_pallas(x_nchw, params):
    """NCHW boundary wrapper: (N, Cin, H, W) -> (N, Cmid, H, W), Cmid == Cin."""
    N, Cin, H, W = x_nchw.shape
    _, _, b = params
    Cmid = b.shape[1] // W
    assert Cin == Cmid, "identity residual requires inps == oups*2 (no downsample)"
    x_lane = jnp.transpose(x_nchw, (0, 2, 3, 1)).reshape(N * H, W * Cin)
    out_lane = basic_block_lane(x_lane.astype(jnp.float32), params, H, N)
    out = out_lane.reshape(N, H, W, Cmid)
    return jnp.transpose(out, (0, 3, 1, 2))


# ----------------------------- references ----------------------------------


def basic_block_ref(x, w1, bn1, w2, bn2, eps=1e-5):
    """Pure-JAX f32 NCHW reference mirroring the PyTorch module (eval-mode BN)."""
    def bn(v, params):
        gamma, beta, mean, var = params
        sh = (1, -1, 1, 1)
        return gamma.reshape(sh) * (v - mean.reshape(sh)) / \
            jnp.sqrt(var.reshape(sh) + eps) + beta.reshape(sh)

    def conv(v, w):
        return lax.conv_general_dilated(
            v, w, (1, 1), ((1, 1), (1, 1)),
            dimension_numbers=('NCHW', 'OIHW', 'NCHW'))

    y = jnp.maximum(bn(conv(x, w1), bn1), 0.0)
    y = bn(conv(y, w2), bn2)
    return jnp.maximum(y + x, 0.0)


def basic_block_matched_ref(x, w1, bn1, w2, bn2, eps=1e-5):
    """Reference mirroring the kernel's numerics: BN scale folded into bf16
    conv weights, bf16 MXU inputs, f32 accumulate/epilogue, f32 residual."""
    def fuse(params):
        gamma, beta, mean, var = params
        s = gamma / jnp.sqrt(var + eps)
        return s, beta - mean * s

    def conv(v, w, s):
        ws = (w * s[:, None, None, None]).astype(jnp.bfloat16)
        return lax.conv_general_dilated(
            v.astype(jnp.bfloat16), ws, (1, 1), ((1, 1), (1, 1)),
            dimension_numbers=('NCHW', 'OIHW', 'NCHW'),
            preferred_element_type=jnp.float32)

    s1, b1 = fuse(bn1)
    s2, b2 = fuse(bn2)
    sh = (1, -1, 1, 1)
    y = jnp.maximum(conv(x, w1, s1) + b1.reshape(sh), 0.0)
    y = conv(y, w2, s2) + b2.reshape(sh)
    return jnp.maximum(y + x, 0.0)


if __name__ == "__main__":
    # BasicBlock(inps=8, oups=4): conv1 8->8, conv2 8->8, identity residual.
    # W * C = 16 * 8 = 128 -> every activation row is one lane-dense vreg row.
    N, Cin, H, W = 2, 8, 16, 16
    Cmid = 8  # oups * expansion

    key = jax.random.PRNGKey(0)
    ks = jax.random.split(key, 11)

    x = jax.random.normal(ks[0], (N, Cin, H, W), jnp.float32)
    w1 = jax.random.normal(ks[1], (Cmid, Cin, 3, 3), jnp.float32) * 0.2
    w2 = jax.random.normal(ks[2], (Cmid, Cmid, 3, 3), jnp.float32) * 0.2

    # BatchNorm params (gamma, beta, running_mean, running_var) — eval mode.
    bn1 = (1.0 + 0.1 * jax.random.normal(ks[3], (Cmid,), jnp.float32),
           0.1 * jax.random.normal(ks[4], (Cmid,), jnp.float32),
           0.1 * jax.random.normal(ks[5], (Cmid,), jnp.float32),
           jax.random.uniform(ks[6], (Cmid,), jnp.float32, 0.5, 1.5))
    bn2 = (1.0 + 0.1 * jax.random.normal(ks[7], (Cmid,), jnp.float32),
           0.1 * jax.random.normal(ks[8], (Cmid,), jnp.float32),
           0.1 * jax.random.normal(ks[9], (Cmid,), jnp.float32),
           jax.random.uniform(ks[10], (Cmid,), jnp.float32, 0.5, 1.5))

    # One-time weight prep, hoisted out of the per-forward path.
    params = prepare_basic_block_params(w1, bn1, w2, bn2, W)

    fwd = jax.jit(basic_block_pallas)
    out = jax.block_until_ready(fwd(x, params))
    assert out.shape == (N, Cmid, H, W)

    # Tight check against a reference with matching bf16-at-MXU numerics.
    ref_m = basic_block_matched_ref(x, w1, bn1, w2, bn2)
    err_m = jnp.max(jnp.abs(out - ref_m))
    assert jnp.allclose(out, ref_m, atol=1e-2, rtol=1e-2), \
        f"max abs err vs bf16-matched ref {err_m}"

    # Loose sanity check against the exact f32 spec (bf16 rounding only).
    ref_f = basic_block_ref(x, w1, bn1, w2, bn2)
    err_f = jnp.max(jnp.abs(out - ref_f))
    assert jnp.allclose(out, ref_f, atol=2.5e-1, rtol=2.5e-1), \
        f"max abs err vs f32 ref {err_f}"

    print("KERNEL_OK")
</pallas_src>

<mosaic_0001>
module attributes {stable_mosaic.version = 11 : i64} {
  func.func @basic_block_kernel(%arg0: i32, %arg1: memref<32x128xf32, #tpu.memory_space<vmem>>, %arg2: memref<384x128xbf16, #tpu.memory_space<vmem>>, %arg3: memref<384x128xbf16, #tpu.memory_space<vmem>>, %arg4: memref<2x128xf32, #tpu.memory_space<vmem>>, %arg5: memref<32x128xf32, #tpu.memory_space<vmem>>) attributes {dimension_semantics = [#tpu.dimension_semantics<arbitrary>], iteration_bounds = array<i64: 1>, scalar_prefetch = 0 : i64, scratch_operands = 0 : i64, tpu.core_type = #tpu.core_type<tc>, window_params = [{pipeline_mode = #tpu.pipeline_mode<synchronous>, transform_indices = @transform_0, window_bounds = array<i64: 32, 128>}, {pipeline_mode = #tpu.pipeline_mode<synchronous>, transform_indices = @transform_1, window_bounds = array<i64: 384, 128>}, {pipeline_mode = #tpu.pipeline_mode<synchronous>, transform_indices = @transform_2, window_bounds = array<i64: 384, 128>}, {pipeline_mode = #tpu.pipeline_mode<synchronous>, transform_indices = @transform_3, window_bounds = array<i64: 2, 128>}, {pipeline_mode = #tpu.pipeline_mode<synchronous>, transform_indices = @transform_4, window_bounds = array<i64: 32, 128>}]} {
    %c0 = arith.constant 0 : index
    %c0_0 = arith.constant 0 : index
    %0 = vector.load %arg1[%c0, %c0_0] : memref<32x128xf32, #tpu.memory_space<vmem>>, vector<32x128xf32>
    %cst = arith.constant 0.000000e+00 : f32
    %1 = vector.broadcast %cst : f32 to vector<1x128xf32>
    %2 = vector.extract_strided_slice %0 {offsets = [0, 0], sizes = [31, 128], strides = [1, 1]} : vector<32x128xf32> to vector<31x128xf32>
    %3 = tpu.concatenate %1, %2 in 0 : vector<1x128xf32>, vector<31x128xf32> -> vector<32x128xf32>
    %4 = vector.extract_strided_slice %0 {offsets = [1, 0], sizes = [31, 128], strides = [1, 1]} : vector<32x128xf32> to vector<31x128xf32>
    %5 = tpu.concatenate %4, %1 in 0 : vector<31x128xf32>, vector<1x128xf32> -> vector<32x128xf32>
    %6 = tpu.iota {dimensions = array<i32: 0>} : vector<32x128xi32>
    %c16_i32 = arith.constant 16 : i32
    %7 = vector.broadcast %c16_i32 : i32 to vector<32x128xi32>
    %8 = arith.cmpi eq, %6, %7 : vector<32x128xi32>
    %c15_i32 = arith.constant 15 : i32
    %9 = vector.broadcast %c15_i32 : i32 to vector<32x128xi32>
    %10 = arith.cmpi eq, %6, %9 : vector<32x128xi32>
    %cst_1 = arith.constant 0.000000e+00 : f32
    %11 = vector.broadcast %cst_1 : f32 to vector<32x128xf32>
    %12 = arith.select %8, %11, %3 : vector<32x128xi1>, vector<32x128xf32>
    %cst_2 = arith.constant 0.000000e+00 : f32
    %13 = vector.broadcast %cst_2 : f32 to vector<32x128xf32>
    %14 = arith.select %10, %13, %5 : vector<32x128xi1>, vector<32x128xf32>
    %15 = tpu.concatenate %12, %0, %14 in 1 : vector<32x128xf32>, vector<32x128xf32>, vector<32x128xf32> -> vector<32x384xf32>
    %16 = arith.truncf %15 : vector<32x384xf32> to vector<32x384xbf16>
    %c0_3 = arith.constant 0 : index
    %c0_4 = arith.constant 0 : index
    %17 = vector.load %arg2[%c0_3, %c0_4] : memref<384x128xbf16, #tpu.memory_space<vmem>>, vector<384x128xbf16>
    %cst_5 = arith.constant dense<0.000000e+00> : vector<32x128xf32>
    %18 = tpu.matmul %16, %17, %cst_5 {dimension_numbers = #tpu.dot_dimension_numbers<[1], [0], [0], [1], [0, 0, 1, 1], [], []>} : vector<32x384xbf16>, vector<384x128xbf16>, vector<32x128xf32> -> vector<32x128xf32>
    %c0_6 = arith.constant 0 : index
    %c0_7 = arith.constant 0 : index
    %19 = vector.load %arg4[%c0_6, %c0_7] : memref<2x128xf32, #tpu.memory_space<vmem>>, vector<1x128xf32>
    %20 = vector.broadcast %19 : vector<1x128xf32> to vector<32x128xf32>
    %21 = arith.addf %18, %20 : vector<32x128xf32>
    %cst_8 = arith.constant 0.000000e+00 : f32
    %22 = vector.broadcast %cst_8 : f32 to vector<32x128xf32>
    %23 = arith.maximumf %21, %22 : vector<32x128xf32>
    %cst_9 = arith.constant 0.000000e+00 : f32
    %24 = vector.broadcast %cst_9 : f32 to vector<1x128xf32>
    %25 = vector.extract_strided_slice %23 {offsets = [0, 0], sizes = [31, 128], strides = [1, 1]} : vector<32x128xf32> to vector<31x128xf32>
    %26 = tpu.concatenate %24, %25 in 0 : vector<1x128xf32>, vector<31x128xf32> -> vector<32x128xf32>
    %27 = vector.extract_strided_slice %23 {offsets = [1, 0], sizes = [31, 128], strides = [1, 1]} : vector<32x128xf32> to vector<31x128xf32>
    %28 = tpu.concatenate %27, %24 in 0 : vector<31x128xf32>, vector<1x128xf32> -> vector<32x128xf32>
    %29 = tpu.iota {dimensions = array<i32: 0>} : vector<32x128xi32>
    %c16_i32_10 = arith.constant 16 : i32
    %30 = vector.broadcast %c16_i32_10 : i32 to vector<32x128xi32>
    %31 = arith.cmpi eq, %29, %30 : vector<32x128xi32>
    %c15_i32_11 = arith.constant 15 : i32
    %32 = vector.broadcast %c15_i32_11 : i32 to vector<32x128xi32>
    %33 = arith.cmpi eq, %29, %32 : vector<32x128xi32>
    %cst_12 = arith.constant 0.000000e+00 : f32
    %34 = vector.broadcast %cst_12 : f32 to vector<32x128xf32>
    %35 = arith.select %31, %34, %26 : vector<32x128xi1>, vector<32x128xf32>
    %cst_13 = arith.constant 0.000000e+00 : f32
    %36 = vector.broadcast %cst_13 : f32 to vector<32x128xf32>
    %37 = arith.select %33, %36, %28 : vector<32x128xi1>, vector<32x128xf32>
    %38 = tpu.concatenate %35, %23, %37 in 1 : vector<32x128xf32>, vector<32x128xf32>, vector<32x128xf32> -> vector<32x384xf32>
    %39 = arith.truncf %38 : vector<32x384xf32> to vector<32x384xbf16>
    %c0_14 = arith.constant 0 : index
    %c0_15 = arith.constant 0 : index
    %40 = vector.load %arg3[%c0_14, %c0_15] : memref<384x128xbf16, #tpu.memory_space<vmem>>, vector<384x128xbf16>
    %cst_16 = arith.constant dense<0.000000e+00> : vector<32x128xf32>
    %41 = tpu.matmul %39, %40, %cst_16 {dimension_numbers = #tpu.dot_dimension_numbers<[1], [0], [0], [1], [0, 0, 1, 1], [], []>} : vector<32x384xbf16>, vector<384x128xbf16>, vector<32x128xf32> -> vector<32x128xf32>
    %c1 = arith.constant 1 : index
    %c0_17 = arith.constant 0 : index
    %42 = vector.load %arg4[%c1, %c0_17] : memref<2x128xf32, #tpu.memory_space<vmem>>, vector<1x128xf32>
    %43 = vector.broadcast %42 : vector<1x128xf32> to vector<32x128xf32>
    %44 = arith.addf %41, %43 : vector<32x128xf32>
    %45 = arith.addf %44, %0 : vector<32x128xf32>
    %cst_18 = arith.constant 0.000000e+00 : f32
    %46 = vector.broadcast %cst_18 : f32 to vector<32x128xf32>
    %47 = arith.maximumf %45, %46 : vector<32x128xf32>
    %c0_19 = arith.constant 0 : index
    %c0_20 = arith.constant 0 : index
    %48 = vector.load %arg5[%c0_19, %c0_20] : memref<32x128xf32, #tpu.memory_space<vmem>>, vector<32x128xf32>
    tpu.vector_store %arg5[%c0_19, %c0_20], %47 {strides = array<i32>} : memref<32x128xf32, #tpu.memory_space<vmem>>, vector<32x128xf32>,
    return
  }
  func.func @transform_0(%arg0: i32) -> (i32, i32) {
    %c0_i32 = arith.constant 0 : i32
    %c0_i32_0 = arith.constant 0 : i32
    %c0_i32_1 = arith.constant 0 : i32
    return %c0_i32, %c0_i32_0 : i32, i32
  }
  func.func @transform_1(%arg0: i32) -> (i32, i32) {
    %c0_i32 = arith.constant 0 : i32
    %c0_i32_0 = arith.constant 0 : i32
    %c0_i32_1 = arith.constant 0 : i32
    return %c0_i32, %c0_i32_0 : i32, i32
  }
  func.func @transform_2(%arg0: i32) -> (i32, i32) {
    %c0_i32 = arith.constant 0 : i32
    %c0_i32_0 = arith.constant 0 : i32
    %c0_i32_1 = arith.constant 0 : i32
    return %c0_i32, %c0_i32_0 : i32, i32
  }
  func.func @transform_3(%arg0: i32) -> (i32, i32) {
    %c0_i32 = arith.constant 0 : i32
    %c0_i32_0 = arith.constant 0 : i32
    %c0_i32_1 = arith.constant 0 : i32
    return %c0_i32, %c0_i32_0 : i32, i32
  }
  func.func @transform_4(%arg0: i32) -> (i32, i32) {
    %c0_i32 = arith.constant 0 : i32
    %c0_i32_0 = arith.constant 0 : i32
    %c0_i32_1 = arith.constant 0 : i32
    return %c0_i32, %c0_i32_0 : i32, i32
  }
}

</mosaic_0001>

<llo_original>
// kernel: basic_block_pallas.1
$region0: #{basic_block_pallas.1}
  #allocation0 [shape = 'u32[]', space=smem, size = 0x4, offset = 0x4, fixed_abs, tag = 'smem constant byte address 0x4 - core index']
  #allocation1 [shape = 'u32[72,128]{1,0:T(1,128)}', space=vmem, size = 0x9000, scoped, tag = 'internal scratch']
  %s0 = inlined_call_operand.vmem [shape: f32[32,128], index: 0, kind: input, shape index: {}]
  %s1 = inlined_call_operand.vmem [shape: bf16[384,128], index: 1, kind: input, shape index: {}]
  %s2 = inlined_call_operand.vmem [shape: bf16[384,128], index: 2, kind: input, shape index: {}]
  %s3 = inlined_call_operand.vmem [shape: f32[2,128], index: 3, kind: input, shape index: {}]
  %s4 = inlined_call_operand.vmem [shape: f32[32,128], index: 4, kind: output, shape index: {}]
  %s5 = sld [smem:[#allocation0]]
  $region26: #{basic_block_pallas.1} parent=0
    _
  %s7 = ssub.s32 1, %s5
  %s8 = scalar_select 0, %s7, %s5
  // Predicated region
  $region2: #{basic_block_pallas.1} parent=0 // pred_check
    _
  $region3: #{basic_block_pallas.1} parent=0 // pred_check_branch
    %10 = sbr.rel (0) target = $region5
  $region4: #{basic_block_pallas.1} parent=0 // pred_region
    _
  $region5: #{basic_block_pallas.1} parent=0 // pred_fallthru
    _
  // Predicated region
  $region6: #{basic_block_pallas.1} parent=0 // pred_check
    _
  $region7: #{basic_block_pallas.1} parent=0 // pred_check_branch
    %12 = sbr.rel (0) target = $region9
  $region8: #{basic_block_pallas.1} parent=0 // pred_region
    _
  $region9: #{basic_block_pallas.1} parent=0 // pred_fallthru
    _
  // Predicated region
  $region10: #{basic_block_pallas.1} parent=0 // pred_check
    _
  $region11: #{basic_block_pallas.1} parent=0 // pred_check_branch
    %14 = sbr.rel (0) target = $region13
  $region12: #{basic_block_pallas.1} parent=0 // pred_region
    _
  $region13: #{basic_block_pallas.1} parent=0 // pred_fallthru
    _
  // Predicated region
  $region14: #{basic_block_pallas.1} parent=0 // pred_check
    _
  $region15: #{basic_block_pallas.1} parent=0 // pred_check_branch
    %16 = sbr.rel (0) target = $region17
  $region16: #{basic_block_pallas.1} parent=0 // pred_region
    _
  $region17: #{basic_block_pallas.1} parent=0 // pred_fallthru
    _
  %v17 = vld [vmem:[%s0] sm:$0xff]
  %v18 = vld [vmem:[%s0 + $0x8] sm:$0xff]
  %v19 = vld [vmem:[%s0 + $0x10] sm:$0xff]
  %v20 = vld [vmem:[%s0 + $0x18] sm:$0xff]
  %vm25 = vcmask 1040384
  %v26 = vrot.slane %v17, 7
  %v27 = vrot.slane %v18, 7
  %v28 = vsel %vm25, %v26, %v27
  %v29 = vrot.slane %v19, 7
  %v30 = vsel %vm25, %v27, %v29
  %v31 = vrot.slane %v20, 7
  %v32 = vsel %vm25, %v29, %v31
  %v37 = vsel %vm25, 0.0, %v26
  %vm38 = vcmask 1046528
  %v39 = vrot.slane %v17, 1
  %v40 = vrot.slane %v18, 1
  %v41 = vsel %vm38, %v39, %v40
  %v42 = vrot.slane %v19, 1
  %v43 = vsel %vm38, %v40, %v42
  %v44 = vrot.slane %v20, 1
  %v45 = vsel %vm38, %v42, %v44
  %v50 = vsel %vm38, %v44, 0.0
  %v51 = vlaneseq
  %v52 = vshrl.u32 %v51, 7
  %v53 = vadd.s32 %v52, 8
  %v54 = vadd.s32 %v52, 16
  %v55 = vadd.s32 %v52, 24
  %vm56 = vcmp.eq.s32.totalorder %v52, 16
  %vm57 = vcmp.eq.s32.totalorder %v53, 16
  %vm58 = vcmp.eq.s32.totalorder %v54, 16
  %vm59 = vcmp.eq.s32.totalorder %v55, 16
  %vm60 = vcmp.eq.s32.totalorder %v52, 15
  %vm61 = vcmp.eq.s32.totalorder %v53, 15
  %vm62 = vcmp.eq.s32.totalorder %v54, 15
  %vm63 = vcmp.eq.s32.totalorder %v55, 15
  %v64 = vsel %vm56, 0.0, %v37
  %v65 = vsel %vm57, 0.0, %v28
  %v66 = vsel %vm58, 0.0, %v30
  %v67 = vsel %vm59, 0.0, %v32
  %v68 = vsel %vm60, 0.0, %v41
  %v69 = vsel %vm61, 0.0, %v43
  %v70 = vsel %vm62, 0.0, %v45
  %v71 = vsel %vm63, 0.0, %v50
  %v72 = vpack.c.bf16 %v65, %v64
  %v73 = vpack.c.bf16 %v18, %v17
  %v74 = vpack.c.bf16 %v69, %v68
  %v75 = vpack.c.bf16 %v67, %v66
  %v76 = vpack.c.bf16 %v20, %v19
  %v77 = vpack.c.bf16 %v71, %v70
  %v78 = vld [vmem:[%s1] sm:$0xf]
  %v79 = vld [vmem:[%s1 + $0x4] sm:$0xf]
  %v80 = vld [vmem:[%s1 + $0x8] sm:$0xf]
  %v81 = vld [vmem:[%s1 + $0xc] sm:$0xf]
  %v82 = vld [vmem:[%s1 + $0x10] sm:$0xf]
  %v83 = vld [vmem:[%s1 + $0x14] sm:$0xf]
  %v84 = vld [vmem:[%s1 + $0x18] sm:$0xf]
  %v85 = vld [vmem:[%s1 + $0x1c] sm:$0xf]
  %v86 = vld [vmem:[%s1 + $0x20] sm:$0xf]
  %v87 = vld [vmem:[%s1 + $0x24] sm:$0xf]
  %v88 = vld [vmem:[%s1 + $0x28] sm:$0xf]
  %v89 = vld [vmem:[%s1 + $0x2c] sm:$0xf]
  %v90 = vld [vmem:[%s1 + $0x30] sm:$0xf]
  %v91 = vld [vmem:[%s1 + $0x34] sm:$0xf]
  %v92 = vld [vmem:[%s1 + $0x38] sm:$0xf]
  %v93 = vld [vmem:[%s1 + $0x3c] sm:$0xf]
  %v94 = vld [vmem:[%s1 + $0x40] sm:$0xf]
  %v95 = vld [vmem:[%s1 + $0x44] sm:$0xf]
  %v96 = vld [vmem:[%s1 + $0x48] sm:$0xf]
  %v97 = vld [vmem:[%s1 + $0x4c] sm:$0xf]
  %v98 = vld [vmem:[%s1 + $0x50] sm:$0xf]
  %v99 = vld [vmem:[%s1 + $0x54] sm:$0xf]
  %v100 = vld [vmem:[%s1 + $0x58] sm:$0xf]
  %v101 = vld [vmem:[%s1 + $0x5c] sm:$0xf]
  %v102 = vld [vmem:[%s1 + $0x60] sm:$0xf]
  %v103 = vld [vmem:[%s1 + $0x64] sm:$0xf]
  %v104 = vld [vmem:[%s1 + $0x68] sm:$0xf]
  %v105 = vld [vmem:[%s1 + $0x6c] sm:$0xf]
  %v106 = vld [vmem:[%s1 + $0x70] sm:$0xf]
  %v107 = vld [vmem:[%s1 + $0x74] sm:$0xf]
  %v108 = vld [vmem:[%s1 + $0x78] sm:$0xf]
  %v109 = vld [vmem:[%s1 + $0x7c] sm:$0xf]
  %v110 = vld [vmem:[%s1 + $0x80] sm:$0xf]
  %v111 = vld [vmem:[%s1 + $0x84] sm:$0xf]
  %v112 = vld [vmem:[%s1 + $0x88] sm:$0xf]
  %v113 = vld [vmem:[%s1 + $0x8c] sm:$0xf]
  %v114 = vld [vmem:[%s1 + $0x90] sm:$0xf]
  %v115 = vld [vmem:[%s1 + $0x94] sm:$0xf]
  %v116 = vld [vmem:[%s1 + $0x98] sm:$0xf]
  %v117 = vld [vmem:[%s1 + $0x9c] sm:$0xf]
  %v118 = vld [vmem:[%s1 + $0xa0] sm:$0xf]
  %v119 = vld [vmem:[%s1 + $0xa4] sm:$0xf]
  %v120 = vld [vmem:[%s1 + $0xa8] sm:$0xf]
  %v121 = vld [vmem:[%s1 + $0xac] sm:$0xf]
  %v122 = vld [vmem:[%s1 + $0xb0] sm:$0xf]
  %v123 = vld [vmem:[%s1 + $0xb4] sm:$0xf]
  %v124 = vld [vmem:[%s1 + $0xb8] sm:$0xf]
  %v125 = vld [vmem:[%s1 + $0xbc] sm:$0xf]
  %v126 = vld [vmem:[%s3] sm:$0x1]
  %v127 = vperm.slane %v126, 0
  %v176 = vunpack.c.l.b16 %v78
  %v177 = vunpack.c.l.b16 %v79
  %v178 = vunpack.c.l.b16 %v80
  %v179 = vunpack.c.l.b16 %v81
  %v180 = vunpack.c.l.b16 %v82
  %v181 = vunpack.c.l.b16 %v83
  %v182 = vunpack.c.l.b16 %v84
  %v183 = vunpack.c.l.b16 %v85
  %v184 = vunpack.c.l.b16 %v86
  %v185 = vunpack.c.l.b16 %v87
  %v186 = vunpack.c.l.b16 %v88
  %v187 = vunpack.c.l.b16 %v89
  %v188 = vunpack.c.l.b16 %v90
  %v189 = vunpack.c.l.b16 %v91
  %v190 = vunpack.c.l.b16 %v92
  %v191 = vunpack.c.l.b16 %v93
  %v192 = vunpack.c.l.b16 %v94
  %v193 = vunpack.c.l.b16 %v95
  %v194 = vunpack.c.l.b16 %v96
  %v195 = vunpack.c.l.b16 %v97
  %v196 = vunpack.c.l.b16 %v98
  %v197 = vunpack.c.l.b16 %v99
  %v198 = vunpack.c.l.b16 %v100
  %v199 = vunpack.c.l.b16 %v101
  %v200 = vunpack.c.l.b16 %v102
  %v201 = vunpack.c.l.b16 %v103
  %v202 = vunpack.c.l.b16 %v104
  %v203 = vunpack.c.l.b16 %v105
  %v204 = vunpack.c.l.b16 %v106
  %v205 = vunpack.c.l.b16 %v107
  %v206 = vunpack.c.l.b16 %v108
  %v207 = vunpack.c.l.b16 %v109
  %v208 = vunpack.c.l.b16 %v110
  %v209 = vunpack.c.l.b16 %v111
  %v210 = vunpack.c.l.b16 %v112
  %v211 = vunpack.c.l.b16 %v113
  %v212 = vunpack.c.l.b16 %v114
  %v213 = vunpack.c.l.b16 %v115
  %v214 = vunpack.c.l.b16 %v116
  %v215 = vunpack.c.l.b16 %v117
  %v216 = vunpack.c.l.b16 %v118
  %v217 = vunpack.c.l.b16 %v119
  %v218 = vunpack.c.l.b16 %v120
  %v219 = vunpack.c.l.b16 %v121
  %v220 = vunpack.c.l.b16 %v122
  %v221 = vunpack.c.l.b16 %v123
  %v222 = vunpack.c.l.b16 %v124
  %v223 = vunpack.c.l.b16 %v125
  %v224 = vpack.c.b16 %v177, %v176
  %v225 = vpack.c.b16 %v179, %v178
  %v226 = vpack.c.b16 %v181, %v180
  %v227 = vpack.c.b16 %v183, %v182
  %v228 = vpack.c.b16 %v185, %v184
  %v229 = vpack.c.b16 %v187, %v186
  %v230 = vpack.c.b16 %v189, %v188
  %v231 = vpack.c.b16 %v191, %v190
  %v232 = vpack.c.b16 %v193, %v192
  %v233 = vpack.c.b16 %v195, %v194
  %v234 = vpack.c.b16 %v197, %v196
  %v235 = vpack.c.b16 %v199, %v198
  %v236 = vpack.c.b16 %v201, %v200
  %v237 = vpack.c.b16 %v203, %v202
  %v238 = vpack.c.b16 %v205, %v204
  %v239 = vpack.c.b16 %v207, %v206
  %v240 = vpack.c.b16 %v209, %v208
  %v241 = vpack.c.b16 %v211, %v210
  %v242 = vpack.c.b16 %v213, %v212
  %v243 = vpack.c.b16 %v215, %v214
  %v244 = vpack.c.b16 %v217, %v216
  %v245 = vpack.c.b16 %v219, %v218
  %v246 = vpack.c.b16 %v221, %v220
  %v247 = vpack.c.b16 %v223, %v222
  %272 = vmatpush.bf16.msra.mxu0 %v231
  %273 = vmatpush.bf16.msra.mxu0 %v230
  %274 = vmatpush.bf16.msra.mxu0 %v229
  %275 = vmatpush.bf16.msra.mxu0 %v228
  %276 = vmatpush.bf16.msra.mxu0 %v227
  %277 = vmatpush.bf16.msra.mxu0 %v226
  %278 = vmatpush.bf16.msra.mxu0 %v225
  %279 = vmatpush.bf16.msra.mxu0 %v224
  %280 = vmatmul.bf16.gmra.mxu0 %v72
  %v281 = vpop.f32.mrf.mxu0
  %v282 = vadd.f32 %v127, %v281
  %v283 = vpop.f32.mrf.mxu0
  %v284 = vadd.f32 %v127, %v283
  %285 = vmatmul.bf16.gmra.mxu0 %v75
  %v286 = vpop.f32.mrf.mxu0
  %v287 = vadd.f32 %v127, %v286
  %v288 = vpop.f32.mrf.mxu0
  %v289 = vadd.f32 %v127, %v288
  %290 = vdwg.mxu0
  %291 = vmatpush.bf16.msra.mxu0 %v239
  %292 = vmatpush.bf16.msra.mxu0 %v238
  %293 = vmatpush.bf16.msra.mxu0 %v237
  %294 = vmatpush.bf16.msra.mxu0 %v236
  %295 = vmatpush.bf16.msra.mxu0 %v235
  %296 = vmatpush.bf16.msra.mxu0 %v234
  %297 = vmatpush.bf16.msra.mxu0 %v233
  %298 = vmatpush.bf16.msra.mxu0 %v232
  %299 = vmatmul.bf16.gmra.mxu0 %v73
  %v300 = vpop.f32.mrf.mxu0
  %v301 = vadd.f32 %v282, %v300
  %v302 = vpop.f32.mrf.mxu0
  %v303 = vadd.f32 %v284, %v302
  %304 = vmatmul.bf16.gmra.mxu0 %v76
  %v305 = vpop.f32.mrf.mxu0
  %v306 = vadd.f32 %v287, %v305
  %v307 = vpop.f32.mrf.mxu0
  %v308 = vadd.f32 %v289, %v307
  %309 = vdwg.mxu0
  %310 = vmatpush.bf16.msra.mxu0 %v247
  %311 = vmatpush.bf16.msra.mxu0 %v246
  %312 = vmatpush.bf16.msra.mxu0 %v245
  %313 = vmatpush.bf16.msra.mxu0 %v244
  %314 = vmatpush.bf16.msra.mxu0 %v243
  %315 = vmatpush.bf16.msra.mxu0 %v242
  %316 = vmatpush.bf16.msra.mxu0 %v241
  %317 = vmatpush.bf16.msra.mxu0 %v240
  %318 = vmatmul.bf16.gmra.mxu0 %v74
  %v319 = vpop.f32.mrf.mxu0
  %v320 = vadd.f32 %v301, %v319
  %v321 = vpop.f32.mrf.mxu0
  %v322 = vadd.f32 %v303, %v321
  %323 = vmatmul.bf16.gmra.mxu0 %v77
  %v324 = vpop.f32.mrf.mxu0
  %v325 = vadd.f32 %v306, %v324
  %v326 = vpop.f32.mrf.mxu0
  %v327 = vadd.f32 %v308, %v326
  %328 = vdwg.mxu0
  %v329 = vmax.f32 %v320, 0.0
  %v330 = vmax.f32 %v322, 0.0
  %v331 = vmax.f32 %v325, 0.0
  %v332 = vmax.f32 %v327, 0.0
  %v337 = vrot.slane %v329, 7
  %v338 = vrot.slane %v330, 7
  %v339 = vsel %vm25, %v337, %v338
  %v340 = vrot.slane %v331, 7
  %v341 = vsel %vm25, %v338, %v340
  %v342 = vrot.slane %v332, 7
  %v343 = vsel %vm25, %v340, %v342
  %v348 = vsel %vm25, 0.0, %v337
  %v349 = vrot.slane %v329, 1
  %v350 = vrot.slane %v330, 1
  %v351 = vsel %vm38, %v349, %v350
  %v352 = vrot.slane %v331, 1
  %v353 = vsel %vm38, %v350, %v352
  %v354 = vrot.slane %v332, 1
  %v355 = vsel %vm38, %v352, %v354
  %v360 = vsel %vm38, %v354, 0.0
  %v361 = vsel %vm56, 0.0, %v348
  %v362 = vsel %vm57, 0.0, %v339
  %v363 = vsel %vm58, 0.0, %v341
  %v364 = vsel %vm59, 0.0, %v343
  %v365 = vsel %vm60, 0.0, %v351
  %v366 = vsel %vm61, 0.0, %v353
  %v367 = vsel %vm62, 0.0, %v355
  %v368 = vsel %vm63, 0.0, %v360
  %v369 = vpack.c.bf16 %v362, %v361
  %v370 = vpack.c.bf16 %v330, %v329
  %v371 = vpack.c.bf16 %v366, %v365
  %v372 = vpack.c.bf16 %v364, %v363
  %v373 = vpack.c.bf16 %v332, %v331
  %v374 = vpack.c.bf16 %v368, %v367
  %v375 = vld [vmem:[%s2] sm:$0xf]
  %v376 = vld [vmem:[%s2 + $0x4] sm:$0xf]
  %v377 = vld [vmem:[%s2 + $0x8] sm:$0xf]
  %v378 = vld [vmem:[%s2 + $0xc] sm:$0xf]
  %v379 = vld [vmem:[%s2 + $0x10] sm:$0xf]
  %v380 = vld [vmem:[%s2 + $0x14] sm:$0xf]
  %v381 = vld [vmem:[%s2 + $0x18] sm:$0xf]
  %v382 = vld [vmem:[%s2 + $0x1c] sm:$0xf]
  %v383 = vld [vmem:[%s2 + $0x20] sm:$0xf]
  %v384 = vld [vmem:[%s2 + $0x24] sm:$0xf]
  %v385 = vld [vmem:[%s2 + $0x28] sm:$0xf]
  %v386 = vld [vmem:[%s2 + $0x2c] sm:$0xf]
  %v387 = vld [vmem:[%s2 + $0x30] sm:$0xf]
  %v388 = vld [vmem:[%s2 + $0x34] sm:$0xf]
  %v389 = vld [vmem:[%s2 + $0x38] sm:$0xf]
  %v390 = vld [vmem:[%s2 + $0x3c] sm:$0xf]
  %v391 = vld [vmem:[%s2 + $0x40] sm:$0xf]
  %v392 = vld [vmem:[%s2 + $0x44] sm:$0xf]
  %v393 = vld [vmem:[%s2 + $0x48] sm:$0xf]
  %v394 = vld [vmem:[%s2 + $0x4c] sm:$0xf]
  %v395 = vld [vmem:[%s2 + $0x50] sm:$0xf]
  %v396 = vld [vmem:[%s2 + $0x54] sm:$0xf]
  %v397 = vld [vmem:[%s2 + $0x58] sm:$0xf]
  %v398 = vld [vmem:[%s2 + $0x5c] sm:$0xf]
  %v399 = vld [vmem:[%s2 + $0x60] sm:$0xf]
  %v400 = vld [vmem:[%s2 + $0x64] sm:$0xf]
  %v401 = vld [vmem:[%s2 + $0x68] sm:$0xf]
  %v402 = vld [vmem:[%s2 + $0x6c] sm:$0xf]
  %v403 = vld [vmem:[%s2 + $0x70] sm:$0xf]
  %v404 = vld [vmem:[%s2 + $0x74] sm:$0xf]
  %v405 = vld [vmem:[%s2 + $0x78] sm:$0xf]
  %v406 = vld [vmem:[%s2 + $0x7c] sm:$0xf]
  %v407 = vld [vmem:[%s2 + $0x80] sm:$0xf]
  %v408 = vld [vmem:[%s2 + $0x84] sm:$0xf]
  %v409 = vld [vmem:[%s2 + $0x88] sm:$0xf]
  %v410 = vld [vmem:[%s2 + $0x8c] sm:$0xf]
  %v411 = vld [vmem:[%s2 + $0x90] sm:$0xf]
  %v412 = vld [vmem:[%s2 + $0x94] sm:$0xf]
  %v413 = vld [vmem:[%s2 + $0x98] sm:$0xf]
  %v414 = vld [vmem:[%s2 + $0x9c] sm:$0xf]
  %v415 = vld [vmem:[%s2 + $0xa0] sm:$0xf]
  %v416 = vld [vmem:[%s2 + $0xa4] sm:$0xf]
  %v417 = vld [vmem:[%s2 + $0xa8] sm:$0xf]
  %v418 = vld [vmem:[%s2 + $0xac] sm:$0xf]
  %v419 = vld [vmem:[%s2 + $0xb0] sm:$0xf]
  %v420 = vld [vmem:[%s2 + $0xb4] sm:$0xf]
  %v421 = vld [vmem:[%s2 + $0xb8] sm:$0xf]
  %v422 = vld [vmem:[%s2 + $0xbc] sm:$0xf]
  %v423 = vld [vmem:[%s3 + $0x1] sm:$0x1]
  %v424 = vperm.slane %v423, 0
  %v473 = vunpack.c.l.b16 %v375
  %v474 = vunpack.c.l.b16 %v376
  %v475 = vunpack.c.l.b16 %v377
  %v476 = vunpack.c.l.b16 %v378
  %v477 = vunpack.c.l.b16 %v379
  %v478 = vunpack.c.l.b16 %v380
  %v479 = vunpack.c.l.b16 %v381
  %v480 = vunpack.c.l.b16 %v382
  %v481 = vunpack.c.l.b16 %v383
  %v482 = vunpack.c.l.b16 %v384
  %v483 = vunpack.c.l.b16 %v385
  %v484 = vunpack.c.l.b16 %v386
  %v485 = vunpack.c.l.b16 %v387
  %v486 = vunpack.c.l.b16 %v388
  %v487 = vunpack.c.l.b16 %v389
  %v488 = vunpack.c.l.b16 %v390
  %v489 = vunpack.c.l.b16 %v391
  %v490 = vunpack.c.l.b16 %v392
  %v491 = vunpack.c.l.b16 %v393
  %v492 = vunpack.c.l.b16 %v394
  %v493 = vunpack.c.l.b16 %v395
  %v494 = vunpack.c.l.b16 %v396
  %v495 = vunpack.c.l.b16 %v397
  %v496 = vunpack.c.l.b16 %v398
  %v497 = vunpack.c.l.b16 %v399
  %v498 = vunpack.c.l.b16 %v400
  %v499 = vunpack.c.l.b16 %v401
  %v500 = vunpack.c.l.b16 %v402
  %v501 = vunpack.c.l.b16 %v403
  %v502 = vunpack.c.l.b16 %v404
  %v503 = vunpack.c.l.b16 %v405
  %v504 = vunpack.c.l.b16 %v406
  %v505 = vunpack.c.l.b16 %v407
  %v506 = vunpack.c.l.b16 %v408
  %v507 = vunpack.c.l.b16 %v409
  %v508 = vunpack.c.l.b16 %v410
  %v509 = vunpack.c.l.b16 %v411
  %v510 = vunpack.c.l.b16 %v412
  %v511 = vunpack.c.l.b16 %v413
  %v512 = vunpack.c.l.b16 %v414
  %v513 = vunpack.c.l.b16 %v415
  %v514 = vunpack.c.l.b16 %v416
  %v515 = vunpack.c.l.b16 %v417
  %v516 = vunpack.c.l.b16 %v418
  %v517 = vunpack.c.l.b16 %v419
  %v518 = vunpack.c.l.b16 %v420
  %v519 = vunpack.c.l.b16 %v421
  %v520 = vunpack.c.l.b16 %v422
  %v521 = vpack.c.b16 %v474, %v473
  %v522 = vpack.c.b16 %v476, %v475
  %v523 = vpack.c.b16 %v478, %v477
  %v524 = vpack.c.b16 %v480, %v479
  %v525 = vpack.c.b16 %v482, %v481
  %v526 = vpack.c.b16 %v484, %v483
  %v527 = vpack.c.b16 %v486, %v485
  %v528 = vpack.c.b16 %v488, %v487
  %v529 = vpack.c.b16 %v490, %v489
  %v530 = vpack.c.b16 %v492, %v491
  %v531 = vpack.c.b16 %v494, %v493
  %v532 = vpack.c.b16 %v496, %v495
  %v533 = vpack.c.b16 %v498, %v497
  %v534 = vpack.c.b16 %v500, %v499
  %v535 = vpack.c.b16 %v502, %v501
  %v536 = vpack.c.b16 %v504, %v503
  %v537 = vpack.c.b16 %v506, %v505
  %v538 = vpack.c.b16 %v508, %v507
  %v539 = vpack.c.b16 %v510, %v509
  %v540 = vpack.c.b16 %v512, %v511
  %v541 = vpack.c.b16 %v514, %v513
  %v542 = vpack.c.b16 %v516, %v515
  %v543 = vpack.c.b16 %v518, %v517
  %v544 = vpack.c.b16 %v520, %v519
  %569 = vmatpush.bf16.msra.mxu0 %v528
  %570 = vmatpush.bf16.msra.mxu0 %v527
  %571 = vmatpush.bf16.msra.mxu0 %v526
  %572 = vmatpush.bf16.msra.mxu0 %v525
  %573 = vmatpush.bf16.msra.mxu0 %v524
  %574 = vmatpush.bf16.msra.mxu0 %v523
  %575 = vmatpush.bf16.msra.mxu0 %v522
  %576 = vmatpush.bf16.msra.mxu0 %v521
  %577 = vmatmul.bf16.gmra.mxu0 %v369
  %v578 = vpop.f32.mrf.mxu0
  %v579 = vadd.f32 %v424, %v578
  %v580 = vpop.f32.mrf.mxu0
  %v581 = vadd.f32 %v424, %v580
  %582 = vmatmul.bf16.gmra.mxu0 %v372
  %v583 = vpop.f32.mrf.mxu0
  %v584 = vadd.f32 %v424, %v583
  %v585 = vpop.f32.mrf.mxu0
  %v586 = vadd.f32 %v424, %v585
  %587 = vdwg.mxu0
  %588 = vmatpush.bf16.msra.mxu0 %v536
  %589 = vmatpush.bf16.msra.mxu0 %v535
  %590 = vmatpush.bf16.msra.mxu0 %v534
  %591 = vmatpush.bf16.msra.mxu0 %v533
  %592 = vmatpush.bf16.msra.mxu0 %v532
  %593 = vmatpush.bf16.msra.mxu0 %v531
  %594 = vmatpush.bf16.msra.mxu0 %v530
  %595 = vmatpush.bf16.msra.mxu0 %v529
  %596 = vmatmul.bf16.gmra.mxu0 %v370
  %v597 = vpop.f32.mrf.mxu0
  %v598 = vadd.f32 %v579, %v597
  %v599 = vpop.f32.mrf.mxu0
  %v600 = vadd.f32 %v581, %v599
  %601 = vmatmul.bf16.gmra.mxu0 %v373
  %v602 = vpop.f32.mrf.mxu0
  %v603 = vadd.f32 %v584, %v602
  %v604 = vpop.f32.mrf.mxu0
  %v605 = vadd.f32 %v586, %v604
  %606 = vdwg.mxu0
  %607 = vmatpush.bf16.msra.mxu0 %v544
  %608 = vmatpush.bf16.msra.mxu0 %v543
  %609 = vmatpush.bf16.msra.mxu0 %v542
  %610 = vmatpush.bf16.msra.mxu0 %v541
  %611 = vmatpush.bf16.msra.mxu0 %v540
  %612 = vmatpush.bf16.msra.mxu0 %v539
  %613 = vmatpush.bf16.msra.mxu0 %v538
  %614 = vmatpush.bf16.msra.mxu0 %v537
  %615 = vmatmul.bf16.gmra.mxu0 %v371
  %v616 = vpop.f32.mrf.mxu0
  %v617 = vadd.f32 %v598, %v616
  %v618 = vpop.f32.mrf.mxu0
  %v619 = vadd.f32 %v600, %v618
  %620 = vmatmul.bf16.gmra.mxu0 %v374
  %v621 = vpop.f32.mrf.mxu0
  %v622 = vadd.f32 %v603, %v621
  %v623 = vpop.f32.mrf.mxu0
  %v624 = vadd.f32 %v605, %v623
  %625 = vdwg.mxu0
  %v626 = vadd.f32 %v617, %v17
  %v627 = vadd.f32 %v619, %v18
  %v628 = vadd.f32 %v622, %v19
  %v629 = vadd.f32 %v624, %v20
  %v630 = vmax.f32 %v626, 0.0
  %v631 = vmax.f32 %v627, 0.0
  %v632 = vmax.f32 %v628, 0.0
  %v633 = vmax.f32 %v629, 0.0
  %634 = vst [vmem:[%s4] sm:$0xff] %v630
  %635 = vst [vmem:[%s4 + $0x8] sm:$0xff] %v631
  %636 = vst [vmem:[%s4 + $0x10] sm:$0xff] %v632
  %637 = vst [vmem:[%s4 + $0x18] sm:$0xff] %v633
  // Predicated region
  $region18: #{basic_block_pallas.1} parent=0 // pred_check
    _
  $region19: #{basic_block_pallas.1} parent=0 // pred_check_branch
    %639 = sbr.rel (0) target = $region21
  $region20: #{basic_block_pallas.1} parent=0 // pred_region
    _
  $region21: #{basic_block_pallas.1} parent=0 // pred_fallthru
    _
  // Predicated region
  $region22: #{basic_block_pallas.1} parent=0 // pred_check
    _
  $region23: #{basic_block_pallas.1} parent=0 // pred_check_branch
    %641 = sbr.rel (0) target = $region25
  $region24: #{basic_block_pallas.1} parent=0 // pred_region
    _
  $region25: #{basic_block_pallas.1} parent=0 // pred_fallthru
    _

</llo_original>
